<compile_context>
chip_gen: v6e
topology: v6e:2x2x1
jax: 0.10.0
libtpu: 0.0.40
codegen_flags: <defaults>
</compile_context>

<pallas_src>
import functools

import jax
import jax.numpy as jnp
from jax.experimental import pallas as pl
from jax.experimental.pallas import tpu as pltpu


def _qbit_kernel(num_layers, x_ref, dcbt_ref, hd_ref, cb_ref, y_ref, bits_ref):
    # x_ref   : (TM, D)   row tile (flattened batch*token rows)
    # dcbt_ref: (D, L)    (cb1 - cb0)^T per layer
    # hd_ref  : (2L, L)   hd[2l+j, k] = codebook[l, j] . dcb[k]
    # cb_ref  : (2L, D)   flattened codebooks
    # y_ref   : (TM, D)   sum of selected codewords over layers
    # bits_ref: (TM, L)   chosen bit (0/1) per layer
    x = x_ref[...]                                                     # (TM, D)

    # All D-contractions for every layer in ONE MXU matmul:
    #   gaps[:, l] = x0 . (cb1_l - cb0_l)   (later corrected per layer below)
    gaps = jnp.dot(x, dcbt_ref[...], preferred_element_type=jnp.float32)  # (TM, L)

    hd = hd_ref[...]                                                   # (2L, L)
    cb = cb_ref[...]                                                   # (2L, D)
    lane = jax.lax.broadcasted_iota(jnp.int32, (1, num_layers), 1)     # (1, L)

    bits_acc = jnp.zeros(bits_ref.shape, jnp.int32)                    # (TM, L)
    y_acc = None
    for l in range(num_layers):                 # static unroll; L is small
        # argmax over 2 codewords == sign of the similarity gap; ties -> 0.
        bit = gaps[:, l:l + 1] > 0.0                                   # (TM, 1)

        # Gram correction: the residual subtraction of the selected codeword
        # only needs to reach later layers' gaps, on (TM, L)-wide data.
        if l + 1 < num_layers:
            corr = jnp.where(bit, hd[2 * l + 1:2 * l + 2, :], hd[2 * l:2 * l + 1, :])
            gaps = gaps - corr

        # Sum of selected codewords (same accumulation order as the reference).
        sel = jnp.where(bit, cb[2 * l + 1:2 * l + 2, :], cb[2 * l:2 * l + 1, :])  # (TM, D)
        y_acc = sel if y_acc is None else y_acc + sel

        # Deposit this layer's bit into its lane; written once after the loop.
        bits_acc = bits_acc + bit.astype(jnp.int32) * (lane == l)

    y_ref[...] = y_acc.astype(y_ref.dtype)
    bits_ref[...] = bits_acc                    # single (TM, L) store per tile


def _lane_pad(n):
    return ((n + 127) // 128) * 128


def _vmem_budgets():
    """Returns (working-set budget for the double-buffered row blocks,
    vmem_limit_bytes), derived from the actual generation's VMEM when the
    runtime exposes it (v7x: 64 MiB, v5e/v6e: 128 MiB)."""
    vmem_phys = 64 * 1024 * 1024          # assume the smallest target (v7x)
    try:
        info = pltpu.get_tpu_info()
        for attr in ("vmem_capacity_bytes", "vmem_bytes", "vmem_size_bytes"):
            val = getattr(info, attr, None)
            if val:
                vmem_phys = int(val)
                break
    except Exception:
        pass
    vmem_limit = min(vmem_phys * 3 // 4, 96 * 1024 * 1024)
    ws_budget = int(vmem_limit * 0.6)     # headroom for codebooks/compiler scratch
    return ws_budget, vmem_limit


def _choose_row_tile(rows, row_bytes, ws_budget):
    """Largest row tile that divides `rows`, is a multiple of 8, fits the VMEM
    working-set budget, and (when possible) keeps the grid >= 2 steps so both
    v7x TensorCores get work."""
    if rows % 8 != 0:
        return rows                       # tiny/odd row count: one full block
    cap = max(8, (ws_budget // max(row_bytes, 1)) // 8 * 8)
    cap = min(cap, rows)
    if rows >= 16:
        cap = min(cap, max(8, (rows // 2) // 8 * 8))
    t = cap
    while t >= 8:
        if rows % t == 0:
            return t
        t -= 8
    return 8


def qbit_forward(x, codebooks, num_bits):
    """x: (B, M, D) f32, codebooks: (L, 2, D) f32 -> (y, {'indices', 'bits'})."""
    B, M, D = x.shape
    L = codebooks.shape[0]
    assert M % num_bits == 0, "input must be divisible by num_bits"
    assert num_bits <= 31, "int32 indices require num_bits <= 31"
    G = M // num_bits

    # Wrapper-side precompute (tiny, full f32 precision).
    cb_flat = codebooks.reshape(2 * L, D)                      # (2L, D)
    dcb = codebooks[:, 1, :] - codebooks[:, 0, :]              # (L, D)
    dcbt = jnp.transpose(dcb)                                  # (D, L)
    hd = jnp.einsum("ad,ld->al", cb_flat, dcb,
                    precision=jax.lax.Precision.HIGHEST)       # (2L, L)

    # Flatten batch*tokens into independent rows and tile them on the grid.
    R = B * M
    x_rows = x.reshape(R, D)

    ws_budget, vmem_limit = _vmem_budgets()
    # Per-row VMEM bytes (double-buffered x + y + bits, lane-padded to 128).
    row_bytes = 2 * 4 * (2 * _lane_pad(D) + _lane_pad(L))
    TM = _choose_row_tile(R, row_bytes, ws_budget)
    grid = (R // TM,)

    kernel = functools.partial(_qbit_kernel, L)
    y_rows, bits_rows = pl.pallas_call(
        kernel,
        out_shape=(
            jax.ShapeDtypeStruct((R, D), x.dtype),
            jax.ShapeDtypeStruct((R, L), jnp.int32),
        ),
        grid=grid,
        in_specs=[
            pl.BlockSpec((TM, D), lambda i: (i, 0)),           # x row tile
            pl.BlockSpec((D, L), lambda i: (0, 0)),            # dcb^T (shared)
            pl.BlockSpec((2 * L, L), lambda i: (0, 0)),        # Gram table (shared)
            pl.BlockSpec((2 * L, D), lambda i: (0, 0)),        # codebooks (shared)
        ],
        out_specs=(
            pl.BlockSpec((TM, D), lambda i: (i, 0)),           # y row tile
            pl.BlockSpec((TM, L), lambda i: (i, 0)),           # bits row tile
        ),
        compiler_params=pltpu.CompilerParams(
            dimension_semantics=("parallel",),
            vmem_limit_bytes=vmem_limit,
        ),
    )(x_rows, dcbt, hd, cb_flat)

    y = y_rows.reshape(B, M, D)
    bits = jnp.transpose(bits_rows.reshape(B, M, L), (0, 2, 1))        # (B, L, M)

    # Exact integer bit-packing in the wrapper.
    bitmask = (2 ** jnp.arange(num_bits - 1, -1, -1)).astype(jnp.int32)
    indices = jnp.sum(bits.reshape(B, L, G, num_bits) * bitmask, axis=-1)

    return y, {"indices": indices, "bits": bits}


def qbit_reference(x, codebooks, num_bits):
    """Pure-JAX reference mirroring the PyTorch eval-mode forward."""
    B, M, D = x.shape
    L = codebooks.shape[0]
    G = M // num_bits
    bitmask = 2 ** jnp.arange(num_bits - 1, -1, -1)
    ys, idxs, bits_all = [], [], []
    for l in range(L):
        cb = codebooks[l]
        sim = jnp.einsum("bmd,nd->bmn", x, cb,
                         precision=jax.lax.Precision.HIGHEST)
        bit = jnp.argmax(sim, axis=-1)                          # (B, M)
        out = cb[bit]                                           # exact gather
        x = x - out
        ys.append(out)
        bits_all.append(bit)
        idxs.append(jnp.sum(bit.reshape(B, G, num_bits) * bitmask, axis=-1))
    y = ys[0]
    for o in ys[1:]:
        y = y + o
    return y, jnp.stack(idxs, axis=1), jnp.stack(bits_all, axis=1)


if __name__ == "__main__":
    # QBit(features=32, num_bits=8, num_layers=4, temperature=1.0), eval mode.
    B, M, D = 2, 16, 32
    num_bits, num_layers = 8, 4

    key = jax.random.PRNGKey(0)
    kx, kc = jax.random.split(key)
    x = jax.random.normal(kx, (B, M, D), dtype=jnp.float32)
    # nn.Parameter(torch.randn(2, features)) per layer, stacked -> (L, 2, D).
    codebooks = jax.random.normal(kc, (num_layers, 2, D), dtype=jnp.float32)

    y, info = qbit_forward(x, codebooks, num_bits)
    jax.block_until_ready((y, info))

    bits = info["bits"]            # (B, L, M) int32
    indices = info["indices"]      # (B, L, G) int32

    # --- Self-consistency checks (independent of near-tie rounding) ---------
    # y must equal the sum of the codewords selected by the reported bits.
    y_rec = jnp.zeros_like(y)
    for l in range(num_layers):
        y_rec = y_rec + codebooks[l][bits[:, l, :]]
    assert jnp.allclose(y, y_rec, atol=1e-5, rtol=1e-5), "y / bits inconsistent"
    # indices must be the exact bit-packing of the reported bits.
    bitmask = (2 ** jnp.arange(num_bits - 1, -1, -1)).astype(jnp.int32)
    idx_rec = jnp.sum(
        bits.reshape(B, num_layers, M // num_bits, num_bits) * bitmask, axis=-1)
    assert jnp.array_equal(indices, idx_rec), "indices / bits inconsistent"

    # --- Comparison against the straightforward reference -------------------
    y_ref, idx_ref, bits_ref = qbit_reference(x, codebooks, num_bits)
    tok_match = jnp.all(bits == bits_ref.astype(jnp.int32), axis=1)     # (B, M)
    num_flip = int(jnp.sum(~tok_match))
    # The Gram/MXU restructure changes FP rounding order; isolated near-tie
    # argmax flips vs the reference are legitimate (see perf review).  Require
    # agreement everywhere else.
    assert num_flip <= 2, f"bit decisions diverge from reference on {num_flip} tokens"
    mask = tok_match[:, :, None]
    assert jnp.allclose(jnp.where(mask, y, y_ref), y_ref, atol=1e-4, rtol=1e-4)
    if num_flip == 0:
        assert jnp.array_equal(indices, idx_ref.astype(jnp.int32))

    print("KERNEL_OK")
</pallas_src>

<mosaic_0001>
module attributes {stable_mosaic.version = 11 : i64} {
  func.func @_qbit_kernel(%arg0: i32, %arg1: memref<16x32xf32, #tpu.memory_space<vmem>>, %arg2: memref<32x4xf32, #tpu.memory_space<vmem>>, %arg3: memref<8x4xf32, #tpu.memory_space<vmem>>, %arg4: memref<8x32xf32, #tpu.memory_space<vmem>>, %arg5: memref<16x32xf32, #tpu.memory_space<vmem>>, %arg6: memref<16x4xi32, #tpu.memory_space<vmem>>) attributes {dimension_semantics = [#tpu.dimension_semantics<parallel>], iteration_bounds = array<i64: 2>, scalar_prefetch = 0 : i64, scratch_operands = 0 : i64, tpu.core_type = #tpu.core_type<tc>, window_params = [{transform_indices = @transform_0, window_bounds = array<i64: 16, 32>}, {pipeline_mode = #tpu.pipeline_mode<synchronous>, transform_indices = @transform_1, window_bounds = array<i64: 32, 4>}, {pipeline_mode = #tpu.pipeline_mode<synchronous>, transform_indices = @transform_2, window_bounds = array<i64: 8, 4>}, {pipeline_mode = #tpu.pipeline_mode<synchronous>, transform_indices = @transform_3, window_bounds = array<i64: 8, 32>}, {transform_indices = @transform_4, window_bounds = array<i64: 16, 32>}, {transform_indices = @transform_5, window_bounds = array<i64: 16, 4>}]} {
    %c0 = arith.constant 0 : index
    %c0_0 = arith.constant 0 : index
    %0 = vector.load %arg1[%c0, %c0_0] : memref<16x32xf32, #tpu.memory_space<vmem>>, vector<16x32xf32>
    %c0_1 = arith.constant 0 : index
    %c0_2 = arith.constant 0 : index
    %1 = vector.load %arg2[%c0_1, %c0_2] : memref<32x4xf32, #tpu.memory_space<vmem>>, vector<32x4xf32>
    %cst = arith.constant dense<0.000000e+00> : vector<16x4xf32>
    %2 = tpu.matmul %0, %1, %cst {dimension_numbers = #tpu.dot_dimension_numbers<[1], [0], [0], [1], [0, 0, 1, 1], [], []>} : vector<16x32xf32>, vector<32x4xf32>, vector<16x4xf32> -> vector<16x4xf32>
    %c0_3 = arith.constant 0 : index
    %c0_4 = arith.constant 0 : index
    %3 = vector.load %arg3[%c0_3, %c0_4] : memref<8x4xf32, #tpu.memory_space<vmem>>, vector<8x4xf32>
    %c0_5 = arith.constant 0 : index
    %c0_6 = arith.constant 0 : index
    %4 = vector.load %arg4[%c0_5, %c0_6] : memref<8x32xf32, #tpu.memory_space<vmem>>, vector<8x32xf32>
    %5 = tpu.iota {dimensions = array<i32: 1>} : vector<1x4xi32>
    %c0_i32 = arith.constant 0 : i32
    %6 = vector.broadcast %c0_i32 : i32 to vector<16x4xi32>
    %7 = vector.extract_strided_slice %2 {offsets = [0, 0], sizes = [16, 1], strides = [1, 1]} : vector<16x4xf32> to vector<16x1xf32>
    %cst_7 = arith.constant 0.000000e+00 : f32
    %8 = vector.broadcast %cst_7 : f32 to vector<16x1xf32>
    %9 = arith.cmpf ogt, %7, %8 : vector<16x1xf32>
    %10 = vector.extract_strided_slice %3 {offsets = [1, 0], sizes = [1, 4], strides = [1, 1]} : vector<8x4xf32> to vector<1x4xf32>
    %11 = vector.extract_strided_slice %3 {offsets = [0, 0], sizes = [1, 4], strides = [1, 1]} : vector<8x4xf32> to vector<1x4xf32>
    %12 = vector.shape_cast %9 : vector<16x1xi1> to vector<16x1xi1>
    %13 = vector.broadcast %12 : vector<16x1xi1> to vector<16x4xi1>
    %14 = vector.shape_cast %10 : vector<1x4xf32> to vector<1x4xf32>
    %15 = vector.broadcast %14 : vector<1x4xf32> to vector<16x4xf32>
    %16 = vector.shape_cast %11 : vector<1x4xf32> to vector<1x4xf32>
    %17 = vector.broadcast %16 : vector<1x4xf32> to vector<16x4xf32>
    %18 = arith.select %13, %15, %17 : vector<16x4xi1>, vector<16x4xf32>
    %19 = arith.subf %2, %18 : vector<16x4xf32>
    %20 = vector.extract_strided_slice %4 {offsets = [1, 0], sizes = [1, 32], strides = [1, 1]} : vector<8x32xf32> to vector<1x32xf32>
    %21 = vector.extract_strided_slice %4 {offsets = [0, 0], sizes = [1, 32], strides = [1, 1]} : vector<8x32xf32> to vector<1x32xf32>
    %22 = vector.shape_cast %9 : vector<16x1xi1> to vector<16x1xi1>
    %23 = vector.broadcast %22 : vector<16x1xi1> to vector<16x32xi1>
    %24 = vector.shape_cast %20 : vector<1x32xf32> to vector<1x32xf32>
    %25 = vector.broadcast %24 : vector<1x32xf32> to vector<16x32xf32>
    %26 = vector.shape_cast %21 : vector<1x32xf32> to vector<1x32xf32>
    %27 = vector.broadcast %26 : vector<1x32xf32> to vector<16x32xf32>
    %28 = arith.select %23, %25, %27 : vector<16x32xi1>, vector<16x32xf32>
    %29 = arith.extui %9 : vector<16x1xi1> to vector<16x1xi32>
    %c0_i32_8 = arith.constant 0 : i32
    %30 = vector.broadcast %c0_i32_8 : i32 to vector<1x4xi32>
    %31 = arith.cmpi eq, %5, %30 : vector<1x4xi32>
    %32 = arith.extui %31 : vector<1x4xi1> to vector<1x4xi32>
    %33 = vector.broadcast %29 : vector<16x1xi32> to vector<16x4xi32>
    %34 = vector.broadcast %32 : vector<1x4xi32> to vector<16x4xi32>
    %35 = arith.muli %33, %34 : vector<16x4xi32>
    %36 = arith.addi %6, %35 : vector<16x4xi32>
    %37 = vector.extract_strided_slice %19 {offsets = [0, 1], sizes = [16, 1], strides = [1, 1]} : vector<16x4xf32> to vector<16x1xf32>
    %cst_9 = arith.constant 0.000000e+00 : f32
    %38 = vector.broadcast %cst_9 : f32 to vector<16x1xf32>
    %39 = arith.cmpf ogt, %37, %38 : vector<16x1xf32>
    %40 = vector.extract_strided_slice %3 {offsets = [3, 0], sizes = [1, 4], strides = [1, 1]} : vector<8x4xf32> to vector<1x4xf32>
    %41 = vector.extract_strided_slice %3 {offsets = [2, 0], sizes = [1, 4], strides = [1, 1]} : vector<8x4xf32> to vector<1x4xf32>
    %42 = vector.shape_cast %39 : vector<16x1xi1> to vector<16x1xi1>
    %43 = vector.broadcast %42 : vector<16x1xi1> to vector<16x4xi1>
    %44 = vector.shape_cast %40 : vector<1x4xf32> to vector<1x4xf32>
    %45 = vector.broadcast %44 : vector<1x4xf32> to vector<16x4xf32>
    %46 = vector.shape_cast %41 : vector<1x4xf32> to vector<1x4xf32>
    %47 = vector.broadcast %46 : vector<1x4xf32> to vector<16x4xf32>
    %48 = arith.select %43, %45, %47 : vector<16x4xi1>, vector<16x4xf32>
    %49 = arith.subf %19, %48 : vector<16x4xf32>
    %50 = vector.extract_strided_slice %4 {offsets = [3, 0], sizes = [1, 32], strides = [1, 1]} : vector<8x32xf32> to vector<1x32xf32>
    %51 = vector.extract_strided_slice %4 {offsets = [2, 0], sizes = [1, 32], strides = [1, 1]} : vector<8x32xf32> to vector<1x32xf32>
    %52 = vector.shape_cast %39 : vector<16x1xi1> to vector<16x1xi1>
    %53 = vector.broadcast %52 : vector<16x1xi1> to vector<16x32xi1>
    %54 = vector.shape_cast %50 : vector<1x32xf32> to vector<1x32xf32>
    %55 = vector.broadcast %54 : vector<1x32xf32> to vector<16x32xf32>
    %56 = vector.shape_cast %51 : vector<1x32xf32> to vector<1x32xf32>
    %57 = vector.broadcast %56 : vector<1x32xf32> to vector<16x32xf32>
    %58 = arith.select %53, %55, %57 : vector<16x32xi1>, vector<16x32xf32>
    %59 = arith.addf %28, %58 : vector<16x32xf32>
    %60 = arith.extui %39 : vector<16x1xi1> to vector<16x1xi32>
    %c1_i32 = arith.constant 1 : i32
    %61 = vector.broadcast %c1_i32 : i32 to vector<1x4xi32>
    %62 = arith.cmpi eq, %5, %61 : vector<1x4xi32>
    %63 = arith.extui %62 : vector<1x4xi1> to vector<1x4xi32>
    %64 = vector.broadcast %60 : vector<16x1xi32> to vector<16x4xi32>
    %65 = vector.broadcast %63 : vector<1x4xi32> to vector<16x4xi32>
    %66 = arith.muli %64, %65 : vector<16x4xi32>
    %67 = arith.addi %36, %66 : vector<16x4xi32>
    %68 = vector.extract_strided_slice %49 {offsets = [0, 2], sizes = [16, 1], strides = [1, 1]} : vector<16x4xf32> to vector<16x1xf32>
    %cst_10 = arith.constant 0.000000e+00 : f32
    %69 = vector.broadcast %cst_10 : f32 to vector<16x1xf32>
    %70 = arith.cmpf ogt, %68, %69 : vector<16x1xf32>
    %71 = vector.extract_strided_slice %3 {offsets = [5, 0], sizes = [1, 4], strides = [1, 1]} : vector<8x4xf32> to vector<1x4xf32>
    %72 = vector.extract_strided_slice %3 {offsets = [4, 0], sizes = [1, 4], strides = [1, 1]} : vector<8x4xf32> to vector<1x4xf32>
    %73 = vector.shape_cast %70 : vector<16x1xi1> to vector<16x1xi1>
    %74 = vector.broadcast %73 : vector<16x1xi1> to vector<16x4xi1>
    %75 = vector.shape_cast %71 : vector<1x4xf32> to vector<1x4xf32>
    %76 = vector.broadcast %75 : vector<1x4xf32> to vector<16x4xf32>
    %77 = vector.shape_cast %72 : vector<1x4xf32> to vector<1x4xf32>
    %78 = vector.broadcast %77 : vector<1x4xf32> to vector<16x4xf32>
    %79 = arith.select %74, %76, %78 : vector<16x4xi1>, vector<16x4xf32>
    %80 = arith.subf %49, %79 : vector<16x4xf32>
    %81 = vector.extract_strided_slice %4 {offsets = [5, 0], sizes = [1, 32], strides = [1, 1]} : vector<8x32xf32> to vector<1x32xf32>
    %82 = vector.extract_strided_slice %4 {offsets = [4, 0], sizes = [1, 32], strides = [1, 1]} : vector<8x32xf32> to vector<1x32xf32>
    %83 = vector.shape_cast %70 : vector<16x1xi1> to vector<16x1xi1>
    %84 = vector.broadcast %83 : vector<16x1xi1> to vector<16x32xi1>
    %85 = vector.shape_cast %81 : vector<1x32xf32> to vector<1x32xf32>
    %86 = vector.broadcast %85 : vector<1x32xf32> to vector<16x32xf32>
    %87 = vector.shape_cast %82 : vector<1x32xf32> to vector<1x32xf32>
    %88 = vector.broadcast %87 : vector<1x32xf32> to vector<16x32xf32>
    %89 = arith.select %84, %86, %88 : vector<16x32xi1>, vector<16x32xf32>
    %90 = arith.addf %59, %89 : vector<16x32xf32>
    %91 = arith.extui %70 : vector<16x1xi1> to vector<16x1xi32>
    %c2_i32 = arith.constant 2 : i32
    %92 = vector.broadcast %c2_i32 : i32 to vector<1x4xi32>
    %93 = arith.cmpi eq, %5, %92 : vector<1x4xi32>
    %94 = arith.extui %93 : vector<1x4xi1> to vector<1x4xi32>
    %95 = vector.broadcast %91 : vector<16x1xi32> to vector<16x4xi32>
    %96 = vector.broadcast %94 : vector<1x4xi32> to vector<16x4xi32>
    %97 = arith.muli %95, %96 : vector<16x4xi32>
    %98 = arith.addi %67, %97 : vector<16x4xi32>
    %99 = vector.extract_strided_slice %80 {offsets = [0, 3], sizes = [16, 1], strides = [1, 1]} : vector<16x4xf32> to vector<16x1xf32>
    %cst_11 = arith.constant 0.000000e+00 : f32
    %100 = vector.broadcast %cst_11 : f32 to vector<16x1xf32>
    %101 = arith.cmpf ogt, %99, %100 : vector<16x1xf32>
    %102 = vector.extract_strided_slice %4 {offsets = [7, 0], sizes = [1, 32], strides = [1, 1]} : vector<8x32xf32> to vector<1x32xf32>
    %103 = vector.extract_strided_slice %4 {offsets = [6, 0], sizes = [1, 32], strides = [1, 1]} : vector<8x32xf32> to vector<1x32xf32>
    %104 = vector.shape_cast %101 : vector<16x1xi1> to vector<16x1xi1>
    %105 = vector.broadcast %104 : vector<16x1xi1> to vector<16x32xi1>
    %106 = vector.shape_cast %102 : vector<1x32xf32> to vector<1x32xf32>
    %107 = vector.broadcast %106 : vector<1x32xf32> to vector<16x32xf32>
    %108 = vector.shape_cast %103 : vector<1x32xf32> to vector<1x32xf32>
    %109 = vector.broadcast %108 : vector<1x32xf32> to vector<16x32xf32>
    %110 = arith.select %105, %107, %109 : vector<16x32xi1>, vector<16x32xf32>
    %111 = arith.addf %90, %110 : vector<16x32xf32>
    %112 = arith.extui %101 : vector<16x1xi1> to vector<16x1xi32>
    %c3_i32 = arith.constant 3 : i32
    %113 = vector.broadcast %c3_i32 : i32 to vector<1x4xi32>
    %114 = arith.cmpi eq, %5, %113 : vector<1x4xi32>
    %115 = arith.extui %114 : vector<1x4xi1> to vector<1x4xi32>
    %116 = vector.broadcast %112 : vector<16x1xi32> to vector<16x4xi32>
    %117 = vector.broadcast %115 : vector<1x4xi32> to vector<16x4xi32>
    %118 = arith.muli %116, %117 : vector<16x4xi32>
    %119 = arith.addi %98, %118 : vector<16x4xi32>
    %c0_12 = arith.constant 0 : index
    %c0_13 = arith.constant 0 : index
    %120 = vector.load %arg5[%c0_12, %c0_13] : memref<16x32xf32, #tpu.memory_space<vmem>>, vector<16x32xf32>
    tpu.vector_store %arg5[%c0_12, %c0_13], %111 {strides = array<i32>} : memref<16x32xf32, #tpu.memory_space<vmem>>, vector<16x32xf32>,
    %c0_14 = arith.constant 0 : index
    %c0_15 = arith.constant 0 : index
    %121 = vector.load %arg6[%c0_14, %c0_15] : memref<16x4xi32, #tpu.memory_space<vmem>>, vector<16x4xi32>
    tpu.vector_store %arg6[%c0_14, %c0_15], %119 {strides = array<i32>} : memref<16x4xi32, #tpu.memory_space<vmem>>, vector<16x4xi32>,
    return
  }
  func.func @transform_0(%arg0: i32) -> (i32, i32) {
    %c0_i32 = arith.constant 0 : i32
    %c0_i32_0 = arith.constant 0 : i32
    return %arg0, %c0_i32 : i32, i32
  }
  func.func @transform_1(%arg0: i32) -> (i32, i32) {
    %c0_i32 = arith.constant 0 : i32
    %c0_i32_0 = arith.constant 0 : i32
    %c0_i32_1 = arith.constant 0 : i32
    return %c0_i32, %c0_i32_0 : i32, i32
  }
  func.func @transform_2(%arg0: i32) -> (i32, i32) {
    %c0_i32 = arith.constant 0 : i32
    %c0_i32_0 = arith.constant 0 : i32
    %c0_i32_1 = arith.constant 0 : i32
    return %c0_i32, %c0_i32_0 : i32, i32
  }
  func.func @transform_3(%arg0: i32) -> (i32, i32) {
    %c0_i32 = arith.constant 0 : i32
    %c0_i32_0 = arith.constant 0 : i32
    %c0_i32_1 = arith.constant 0 : i32
    return %c0_i32, %c0_i32_0 : i32, i32
  }
  func.func @transform_4(%arg0: i32) -> (i32, i32) {
    %c0_i32 = arith.constant 0 : i32
    %c0_i32_0 = arith.constant 0 : i32
    return %arg0, %c0_i32 : i32, i32
  }
  func.func @transform_5(%arg0: i32) -> (i32, i32) {
    %c0_i32 = arith.constant 0 : i32
    %c0_i32_0 = arith.constant 0 : i32
    return %arg0, %c0_i32 : i32, i32
  }
}

</mosaic_0001>

<llo_original>
// kernel: tpu_custom_call.1
$region0: #{tpu_custom_call.1}
  #allocation0 [shape = 'u32[]', space=smem, size = 0x4, offset = 0x4, fixed_abs, tag = 'smem constant byte address 0x4 - core index']
  #allocation1 [shape = 'u32[144,128]{1,0:T(1,128)}', space=vmem, size = 0x12000, scoped, tag = 'internal scratch']
  %s0 = inlined_call_operand.vmem [shape: f32[32,32], index: 0, kind: input, shape index: {}]
  %s1 = inlined_call_operand.vmem [shape: f32[32,4], index: 1, kind: input, shape index: {}]
  %s2 = inlined_call_operand.vmem [shape: f32[8,4], index: 2, kind: input, shape index: {}]
  %s3 = inlined_call_operand.vmem [shape: f32[8,32], index: 3, kind: input, shape index: {}]
  %s4 = inlined_call_operand.hbm [shape: f32[32,32], index: 4, kind: output, shape index: {0}]
  %s5 = inlined_call_operand.vmem [shape: s32[32,4], index: 5, kind: output, shape index: {1}]
  %6 = xla_tuple %s4, %s5
  %s7 = sld [smem:[#allocation0]]
  $region57: #{tpu_custom_call.1} parent=0
    _
  %s9 = ssub.s32 1, %s7
  %s10 = scalar_select 0, %s9, %s7
  $region1: #{tpu_custom_call.1} parent=0
    #allocation2 [shape = 'u8[16384]{0}', space=vmem, size = 0x4000, scoped, tag = 'output window, operand 0']
    #allocation3 [shape = 's32[2]{0}', space=sflag, size = 0x8, scoped, tag = 'scoped memory for tpu_custom_call.1']
    %11 = vsyncpa [#allocation3], 0
    %s12 = scalar_lea.sflag [#allocation3], 1
    %13 = vsyncpa %s12, 0
    loop: start=0, step=1, limit=4
    $region2: #{tpu_custom_call.1} parent=1 // loop_pre_header
      _
    $region3: #{tpu_custom_call.1} parent=1 // loop_header
      %s15 = sphi 0, %s19
      %p16 = scmp.ge.s32.totalorder %s15, 4
      %s25 = sphi 0, %s27
      %s28 = sphi 0, %s25
      %s29 = sphi 0, %s28
      %s45 = sphi 0, %s29
      %s49 = sphi 0, %s49
      %s51 = sphi 0, %s49
      %s52 = sphi 0, %s51
      %s66 = sphi 0, %s52
      %s70 = sphi 0, %s70
      %s72 = sphi 0, %s70
      %s73 = sphi 0, %s72
      %s87 = sphi 0, %s73
      %s91 = sphi 0, %s91
      %s93 = sphi 0, %s91
      %s94 = sphi 0, %s93
      %s108 = sphi 0, %s94
      %s114 = sphi 0, %s116
      %s117 = sphi 0, %s114
      %s118 = sphi 0, %s117
      %s134 = sphi 0, %s118
      %s140 = sphi 0, %s142
      %s143 = sphi 0, %s140
      %s144 = sphi 0, %s143
      %s160 = sphi 0, %s144
    $region4: #{tpu_custom_call.1} parent=1 // loop_header_branch
      %18 = sbr.rel (%p16) target = $region8
    $region5: #{tpu_custom_call.1} parent=1 // loop_body
      %s20 = ssub.s32 %s15, 1
      %s21 = ssub.s32 %s15, 2
      %s22 = sadd.s32 %s15, 1
      %s23 = ssub.s32 %s15, %s22
      %p24 = scmp.eq.s32.totalorder %s23, 0
      %s26 = sadd.s32 %s25, 1
      %s27 = scalar_select %p24, %s25, %s26
      %p30 = pneg %p24
      %p31 = scmp.eq.s32.totalorder %s15, 1
      %p32 = por %p30, %p31
      %p33 = scmp.ne.s32.totalorder %s25, %s28
      %p34 = scmp.eq.s32.totalorder %s15, 0
      %p35 = por %p33, %p34
      %p36 = scmp.ne.s32.totalorder %s25, %s28
      %p37 = scmp.eq.s32.totalorder %s20, 1
      %p38 = por %p36, %p37
      %p39 = scmp.ne.s32.totalorder %s28, %s29
      %p40 = scmp.eq.s32.totalorder %s20, 0
      %p41 = por %p39, %p40
      %p42 = scmp.ne.s32.totalorder %s28, %s29
      %p43 = scmp.eq.s32.totalorder %s21, 1
      %p44 = por %p42, %p43
      %p46 = scmp.ne.s32.totalorder %s29, %s45
      %p47 = scmp.eq.s32.totalorder %s21, 0
      %p48 = por %p46, %p47
      %s50 = sadd.s32 %s49, 1
      %p53 = scmp.eq.s32.totalorder %s15, 1
      %p54 = scmp.ne.s32.totalorder %s49, %s51
      %p55 = scmp.eq.s32.totalorder %s15, 0
      %p56 = por %p54, %p55
      %p57 = scmp.ne.s32.totalorder %s49, %s51
      %p58 = scmp.eq.s32.totalorder %s20, 1
      %p59 = por %p57, %p58
      %p60 = scmp.ne.s32.totalorder %s51, %s52
      %p61 = scmp.eq.s32.totalorder %s20, 0
      %p62 = por %p60, %p61
      %p63 = scmp.ne.s32.totalorder %s51, %s52
      %p64 = scmp.eq.s32.totalorder %s21, 1
      %p65 = por %p63, %p64
      %p67 = scmp.ne.s32.totalorder %s52, %s66
      %p68 = scmp.eq.s32.totalorder %s21, 0
      %p69 = por %p67, %p68
      %s71 = sadd.s32 %s70, 1
      %p74 = scmp.eq.s32.totalorder %s15, 1
      %p75 = scmp.ne.s32.totalorder %s70, %s72
      %p76 = scmp.eq.s32.totalorder %s15, 0
      %p77 = por %p75, %p76
      %p78 = scmp.ne.s32.totalorder %s70, %s72
      %p79 = scmp.eq.s32.totalorder %s20, 1
      %p80 = por %p78, %p79
      %p81 = scmp.ne.s32.totalorder %s72, %s73
      %p82 = scmp.eq.s32.totalorder %s20, 0
      %p83 = por %p81, %p82
      %p84 = scmp.ne.s32.totalorder %s72, %s73
      %p85 = scmp.eq.s32.totalorder %s21, 1
      %p86 = por %p84, %p85
      %p88 = scmp.ne.s32.totalorder %s73, %s87
      %p89 = scmp.eq.s32.totalorder %s21, 0
      %p90 = por %p88, %p89
      %s92 = sadd.s32 %s91, 1
      %p95 = scmp.eq.s32.totalorder %s15, 1
      %p96 = scmp.ne.s32.totalorder %s91, %s93
      %p97 = scmp.eq.s32.totalorder %s15, 0
      %p98 = por %p96, %p97
      %p99 = scmp.ne.s32.totalorder %s91, %s93
      %p100 = scmp.eq.s32.totalorder %s20, 1
      %p101 = por %p99, %p100
      %p102 = scmp.ne.s32.totalorder %s93, %s94
      %p103 = scmp.eq.s32.totalorder %s20, 0
      %p104 = por %p102, %p103
      %p105 = scmp.ne.s32.totalorder %s93, %s94
      %p106 = scmp.eq.s32.totalorder %s21, 1
      %p107 = por %p105, %p106
      %p109 = scmp.ne.s32.totalorder %s94, %s108
      %p110 = scmp.eq.s32.totalorder %s21, 0
      %p111 = por %p109, %p110
      %s112 = ssub.s32 %s15, %s22
      %p113 = scmp.eq.s32.totalorder %s112, 0
      %s115 = sadd.s32 %s114, 1
      %s116 = scalar_select %p113, %s114, %s115
      %p119 = pneg %p113
      %p120 = scmp.eq.s32.totalorder %s15, 1
      %p121 = por %p119, %p120
      %p122 = scmp.ne.s32.totalorder %s114, %s117
      %p123 = scmp.eq.s32.totalorder %s15, 0
      %p124 = por %p122, %p123
      %p125 = scmp.ne.s32.totalorder %s114, %s117
      %p126 = scmp.eq.s32.totalorder %s20, 1
      %p127 = por %p125, %p126
      %p128 = scmp.ne.s32.totalorder %s117, %s118
      %p129 = scmp.eq.s32.totalorder %s20, 0
      %p130 = por %p128, %p129
      %p131 = scmp.ne.s32.totalorder %s117, %s118
      %p132 = scmp.eq.s32.totalorder %s21, 1
      %p133 = por %p131, %p132
      %p135 = scmp.ne.s32.totalorder %s118, %s134
      %p136 = scmp.eq.s32.totalorder %s21, 0
      %p137 = por %p135, %p136
      %s138 = ssub.s32 %s15, %s22
      %p139 = scmp.eq.s32.totalorder %s138, 0
      %s141 = sadd.s32 %s140, 1
      %s142 = scalar_select %p139, %s140, %s141
      %p145 = pneg %p139
      %p146 = scmp.eq.s32.totalorder %s15, 1
      %p147 = por %p145, %p146
      %p148 = scmp.ne.s32.totalorder %s140, %s143
      %p149 = scmp.eq.s32.totalorder %s15, 0
      %p150 = por %p148, %p149
      %p151 = scmp.ne.s32.totalorder %s140, %s143
      %p152 = scmp.eq.s32.totalorder %s20, 1
      %p153 = por %p151, %p152
      %p154 = scmp.ne.s32.totalorder %s143, %s144
      %p155 = scmp.eq.s32.totalorder %s20, 0
      %p156 = por %p154, %p155
      %p157 = scmp.ne.s32.totalorder %s143, %s144
      %p158 = scmp.eq.s32.totalorder %s21, 1
      %p159 = por %p157, %p158
      %p161 = scmp.ne.s32.totalorder %s144, %s160
      %p162 = scmp.eq.s32.totalorder %s21, 0
      %p163 = por %p161, %p162
      %p164 = scmp.le.s32.totalorder 1, %s15
      %p165 = scmp.lt.s32.totalorder %s15, 3
      %p166 = pnand %p164, %p165
      %p167 = pneg %p166
      // Predicated region
      $region9: #{tpu_custom_call.1} parent=5 // pred_check
        _
      $region10: #{tpu_custom_call.1} parent=5 // pred_check_branch
        %169 = sbr.rel (%p166) target = $region12
      $region11: #{tpu_custom_call.1} parent=5 // pred_region
        %s170 = ssub.s32 %s15, 1
        // Predicated region
        $region13: #{tpu_custom_call.1} parent=11 // pred_check
          %p171 = pneg %p62
        $region14: #{tpu_custom_call.1} parent=11 // pred_check_branch
          %173 = sbr.rel (%p171) target = $region16
        $region15: #{tpu_custom_call.1} parent=11 // pred_region
          _
        $region16: #{tpu_custom_call.1} parent=11 // pred_fallthru
          _
        // Predicated region
        $region17: #{tpu_custom_call.1} parent=11 // pred_check
          %p174 = pneg %p83
        $region18: #{tpu_custom_call.1} parent=11 // pred_check_branch
          %176 = sbr.rel (%p174) target = $region20
        $region19: #{tpu_custom_call.1} parent=11 // pred_region
          _
        $region20: #{tpu_custom_call.1} parent=11 // pred_fallthru
          _
        // Predicated region
        $region21: #{tpu_custom_call.1} parent=11 // pred_check
          %p177 = pneg %p104
        $region22: #{tpu_custom_call.1} parent=11 // pred_check_branch
          %179 = sbr.rel (%p177) target = $region24
        $region23: #{tpu_custom_call.1} parent=11 // pred_region
          _
        $region24: #{tpu_custom_call.1} parent=11 // pred_fallthru
          _
      $region12: #{tpu_custom_call.1} parent=5 // pred_fallthru
        _
      %p180 = scmp.lt.s32.totalorder %s15, 2
      // Predicated region
      $region25: #{tpu_custom_call.1} parent=5 // pred_check
        %p181 = pneg %p180
      $region26: #{tpu_custom_call.1} parent=5 // pred_check_branch
        %183 = sbr.rel (%p181) target = $region28
      $region27: #{tpu_custom_call.1} parent=5 // pred_region
        // Predicated region
        $region29: #{tpu_custom_call.1} parent=27 // pred_check
          %p184 = pneg %p35
        $region30: #{tpu_custom_call.1} parent=27 // pred_check_branch
          %186 = sbr.rel (%p184) target = $region32
        $region31: #{tpu_custom_call.1} parent=27 // pred_region
          %s187 = smul.u32 2, %s15
          %p188 = scmp.lt.s32.totalorder %s187, 3
          %s189 = scalar_select %p188, %s187, 3
          %s190 = smul.addr %s189, 8
          %s191 = scalar_lea.vmem %s0, %s190
          %s192 = smul.u32 2, %s15
        $region32: #{tpu_custom_call.1} parent=27 // pred_fallthru
          _
      $region28: #{tpu_custom_call.1} parent=5 // pred_fallthru
        _
      %p193 = scmp.le.s32.totalorder 1, %s15
      %p194 = scmp.lt.s32.totalorder %s15, 3
      %p195 = pnand %p193, %p194
      %p196 = pneg %p195
      // Predicated region
      $region33: #{tpu_custom_call.1} parent=5 // pred_check
        _
      $region34: #{tpu_custom_call.1} parent=5 // pred_check_branch
        %198 = sbr.rel (%p195) target = $region36
      $region35: #{tpu_custom_call.1} parent=5 // pred_region
        %s199 = ssub.s32 %s15, 1
        %s200 = smul.u32 2, %s20
        %p201 = scmp.lt.s32.totalorder %s200, 3
        %s202 = scalar_select %p201, %s200, 3
        %s203 = smul.addr %s202, 8
        %s204 = scalar_lea.vmem %s0, %s203
        %p205 = pneg %p41
        %p206 = pneg %p38
        %p207 = pneg %p62
        %p208 = pneg %p59
        %p209 = pneg %p83
        %p210 = pneg %p80
        %p211 = pneg %p104
        %p212 = pneg %p101
        %p213 = pneg %p130
        %p214 = pneg %p127
        %s215 = sand.u32 %s117, 1
        %s216 = scalar_lea.sflag [#allocation3], %s215
        %s217 = sand.u32 %s117, 1
        %s218 = smul.addr %s217, 16
        %s219 = scalar_lea.vmem [#allocation2], %s218
        %p220 = pneg %p156
        %p221 = pneg %p153
        %s222 = smul.u32 2, %s20
        %p223 = scmp.lt.s32.totalorder %s222, 3
        %s224 = scalar_select %p223, %s222, 3
        %s225 = smul.addr %s224, 8
        %s226 = scalar_lea.vmem %s5, %s225
        %s227 = smul.u32 2, %s20
        %p228 = scmp.lt.s32.totalorder %s227, 3
        %s229 = scalar_select %p228, %s227, 3
        %s230 = smul.addr %s229, 8
        %s231 = scalar_lea.vmem %s0, %s230
        %s232 = smul.u32 2, %s20
        %s233 = smul.u32 2, %s20
        %s234 = smul.u32 2, %s20
        %p235 = scmp.lt.s32.totalorder %s234, 3
        %s236 = scalar_select %p235, %s234, 3
        %s237 = smul.addr %s236, 8
        %s238 = scalar_lea.vmem %s5, %s237
        %s239 = smul.u32 2, %s20
        %v240 = vld [vmem:[%s231] sm:$0xff]
        %v241 = vld [vmem:[%s231 + $0x8] sm:$0xff]
        %v242 = vld [vmem:[%s1] sm:$0xff]
        %v243 = vld [vmem:[%s1 + $0x8] sm:$0xff]
        %v244 = vld [vmem:[%s1 + $0x10] sm:$0xff]
        %v245 = vld [vmem:[%s1 + $0x18] sm:$0xff]
        %vm246 = vcmask 261120
        %v248 = vsel %vm246, %v240, 0
        %v251 = vsel %vm246, %v241, 0
        %253 = vmatprep.subr.mxu0 0.0
        %254 = vmatpush1.msra.mxu0 0.0
        %255 = vmatprep.subr.mxu0 0.0
        %256 = vmatpush1.msra.mxu0 0.0
        %257 = vmatprep.subr.mxu0 0.0
        %258 = vmatpush1.msra.mxu0 0.0
        %259 = vmatprep.subr.mxu0 0.0
        %260 = vmatpush1.msra.mxu0 0.0
        %261 = vmatprep.subr.mxu0 0.0
        %262 = vmatpush1.msra.mxu0 0.0
        %263 = vmatprep.subr.mxu0 0.0
        %264 = vmatpush1.msra.mxu0 0.0
        %265 = vmatprep.subr.mxu0 0.0
        %266 = vmatpush1.msra.mxu0 0.0
        %267 = vmatprep.subr.mxu0 0.0
        %268 = vmatpush1.msra.mxu0 0.0
        %269 = vmatprep.subr.mxu0 0.0
        %270 = vmatpush1.msra.mxu0 0.0
        %271 = vmatprep.subr.mxu0 0.0
        %272 = vmatpush1.msra.mxu0 0.0
        %273 = vmatprep.subr.mxu0 0.0
        %274 = vmatpush1.msra.mxu0 0.0
        %275 = vmatprep.subr.mxu0 0.0
        %276 = vmatpush1.msra.mxu0 0.0
        %277 = vmatprep.subr.mxu0 0.0
        %278 = vmatpush1.msra.mxu0 %v245
        %279 = vmatprep.subr.mxu0 0.0
        %280 = vmatpush1.msra.mxu0 %v244
        %281 = vmatprep.subr.mxu0 0.0
        %282 = vmatpush1.msra.mxu0 %v243
        %283 = vmatprep.subr.mxu0 0.0
        %284 = vmatpush1.msra.mxu0 %v242
        %285 = vmatprep.subr.mxu0 0.0
        %286 = vmatpush2.msra.mxu0 0.0
        %287 = vmatprep.subr.mxu0 0.0
        %288 = vmatpush2.msra.mxu0 0.0
        %289 = vmatprep.subr.mxu0 0.0
        %290 = vmatpush2.msra.mxu0 0.0
        %291 = vmatprep.subr.mxu0 0.0
        %292 = vmatpush2.msra.mxu0 0.0
        %293 = vmatprep.subr.mxu0 0.0
        %294 = vmatpush2.msra.mxu0 0.0
        %295 = vmatprep.subr.mxu0 0.0
        %296 = vmatpush2.msra.mxu0 0.0
        %297 = vmatprep.subr.mxu0 0.0
        %298 = vmatpush2.msra.mxu0 0.0
        %299 = vmatprep.subr.mxu0 0.0
        %300 = vmatpush2.msra.mxu0 0.0
        %301 = vmatprep.subr.mxu0 0.0
        %302 = vmatpush2.msra.mxu0 0.0
        %303 = vmatprep.subr.mxu0 0.0
        %304 = vmatpush2.msra.mxu0 0.0
        %305 = vmatprep.subr.mxu0 0.0
        %306 = vmatpush2.msra.mxu0 0.0
        %307 = vmatprep.subr.mxu0 0.0
        %308 = vmatpush2.msra.mxu0 0.0
        %309 = vmatprep.subr.mxu0 0.0
        %310 = vmatpush2.msra.mxu0 0.0
        %311 = vmatprep.subr.mxu0 0.0
        %312 = vmatpush2.msra.mxu0 0.0
        %313 = vmatprep.subr.mxu0 0.0
        %314 = vmatpush2.msra.mxu0 0.0
        %315 = vmatprep.subr.mxu0 0.0
        %316 = vmatpush2.msra.mxu0 0.0
        %317 = vmatprep.mubr.f32.mxu0 0.0
        %318 = vmatmul.mubr.f32.gmra.mxu0 %v248
        %v319 = vpop.f32.mrf.mxu0
        %v320 = vadd.f32 0.0, %v319
        %v321 = vpop.f32.mrf.mxu0
        %322 = vmatprep.mubr.f32.mxu0 0.0
        %323 = vmatmul.mubr.f32.gmra.mxu0 %v251
        %v324 = vpop.f32.mrf.mxu0
        %v325 = vadd.f32 0.0, %v324
        %v326 = vpop.f32.mrf.mxu0
        %327 = vdwg.mxu0
        %v328 = vld [vmem:[%s2] sm:$0xff]
        %v329 = vld [vmem:[%s3] sm:$0xff]
        %v330 = vlaneseq
        %v331 = vand.u32 %v330, 127
        %vm332 = vcmp.gt.f32.partialorder %v320, 0.0
        %vm333 = vcmp.gt.f32.partialorder %v325, 0.0
        %v334 = vsel %vm332, 1, 0
        %v335 = vsel %vm333, 1, 0
        %336 = vset.pattern.permute.xlu0 0
        %337 = vperm.xlu0 %336, %v334
        %v338 = vpop.permute.xlu0 %337
        %339 = vset.pattern.permute.xlu0 0
        %340 = vperm.xlu0 %339, %v335
        %v341 = vpop.permute.xlu0 %340
        %vm342 = vcmp.eq.s32.totalorder %v338, 1
        %vm343 = vcmp.eq.s32.totalorder %v341, 1
        %v344 = vlaneseq
        %v345 = vshrl.u32 %v344, 7
        %v346 = vsub.s32 1, %v345
        %v347 = vrot.slane %v328, %v346
        %v348 = vlaneseq
        %v349 = vshrl.u32 %v348, 7
        %v350 = vsub.s32 0, %v349
        %v351 = vrot.slane %v328, %v350
        %v352 = vsel %vm342, %v347, %v351
        %v353 = vsel %vm343, %v347, %v351
        %v354 = vsub.f32 %v320, %v352
        %v355 = vsub.f32 %v325, %v353
        %v356 = vlaneseq
        %v357 = vshrl.u32 %v356, 7
        %v358 = vsub.s32 1, %v357
        %v359 = vrot.slane %v329, %v358
        %v360 = vlaneseq
        %v361 = vshrl.u32 %v360, 7
        %v362 = vsub.s32 0, %v361
        %v363 = vrot.slane %v329, %v362
        %v364 = vsel %vm342, %v359, %v363
        %v365 = vsel %vm343, %v359, %v363
        %vm366 = vcmp.eq.s32.totalorder %v331, 0
        %v367 = vsel %vm366, 1, 0
        %v368 = vmul.u32 %v338, %v367
        %v369 = vmul.u32 %v341, %v367
        %vm370 = vcmp.gt.f32.partialorder %v354, 0.0
        %vm371 = vcmp.gt.f32.partialorder %v355, 0.0
        %v372 = vsel %vm370, 1, 0
        %v373 = vsel %vm371, 1, 0
        %374 = vset.pattern.permute.xlu0 1
        %375 = vperm.xlu0 %374, %v372
        %v376 = vpop.permute.xlu0 %375
        %377 = vset.pattern.permute.xlu0 1
        %378 = vperm.xlu0 %377, %v373
        %v379 = vpop.permute.xlu0 %378
        %vm380 = vcmp.eq.s32.totalorder %v376, 1
        %vm381 = vcmp.eq.s32.totalorder %v379, 1
        %v382 = vlaneseq
        %v383 = vshrl.u32 %v382, 7
        %v384 = vsub.s32 3, %v383
        %v385 = vrot.slane %v328, %v384
        %v386 = vlaneseq
        %v387 = vshrl.u32 %v386, 7
        %v388 = vsub.s32 2, %v387
        %v389 = vrot.slane %v328, %v388
        %v390 = vsel %vm380, %v385, %v389
        %v391 = vsel %vm381, %v385, %v389
        %v392 = vsub.f32 %v354, %v390
        %v393 = vsub.f32 %v355, %v391
        %v394 = vlaneseq
        %v395 = vshrl.u32 %v394, 7
        %v396 = vsub.s32 3, %v395
        %v397 = vrot.slane %v329, %v396
        %v398 = vlaneseq
        %v399 = vshrl.u32 %v398, 7
        %v400 = vsub.s32 2, %v399
        %v401 = vrot.slane %v329, %v400
        %v402 = vsel %vm380, %v397, %v401
        %v403 = vsel %vm381, %v397, %v401
        %v404 = vadd.f32 %v364, %v402
        %v405 = vadd.f32 %v365, %v403
        %vm406 = vcmp.eq.s32.totalorder %v331, 1
        %v407 = vsel %vm406, 1, 0
        %v408 = vmul.u32 %v376, %v407
        %v409 = vmul.u32 %v379, %v407
        %v410 = vadd.s32 %v368, %v408
        %v411 = vadd.s32 %v369, %v409
        %vm412 = vcmp.gt.f32.partialorder %v392, 0.0
        %vm413 = vcmp.gt.f32.partialorder %v393, 0.0
        %v414 = vsel %vm412, 1, 0
        %v415 = vsel %vm413, 1, 0
        %416 = vset.pattern.permute.xlu0 2
        %417 = vperm.xlu0 %416, %v414
        %v418 = vpop.permute.xlu0 %417
        %419 = vset.pattern.permute.xlu0 2
        %420 = vperm.xlu0 %419, %v415
        %v421 = vpop.permute.xlu0 %420
        %vm422 = vcmp.eq.s32.totalorder %v418, 1
        %vm423 = vcmp.eq.s32.totalorder %v421, 1
        %v424 = vlaneseq
        %v425 = vshrl.u32 %v424, 7
        %v426 = vsub.s32 5, %v425
        %v427 = vrot.slane %v328, %v426
        %v428 = vlaneseq
        %v429 = vshrl.u32 %v428, 7
        %v430 = vsub.s32 4, %v429
        %v431 = vrot.slane %v328, %v430
        %v432 = vsel %vm422, %v427, %v431
        %v433 = vsel %vm423, %v427, %v431
        %v434 = vsub.f32 %v392, %v432
        %v435 = vsub.f32 %v393, %v433
        %v436 = vlaneseq
        %v437 = vshrl.u32 %v436, 7
        %v438 = vsub.s32 5, %v437
        %v439 = vrot.slane %v329, %v438
        %v440 = vlaneseq
        %v441 = vshrl.u32 %v440, 7
        %v442 = vsub.s32 4, %v441
        %v443 = vrot.slane %v329, %v442
        %v444 = vsel %vm422, %v439, %v443
        %v445 = vsel %vm423, %v439, %v443
        %v446 = vadd.f32 %v404, %v444
        %v447 = vadd.f32 %v405, %v445
        %vm448 = vcmp.eq.s32.totalorder %v331, 2
        %v449 = vsel %vm448, 1, 0
        %v450 = vmul.u32 %v418, %v449
        %v451 = vmul.u32 %v421, %v449
        %v452 = vadd.s32 %v410, %v450
        %v453 = vadd.s32 %v411, %v451
        %vm454 = vcmp.gt.f32.partialorder %v434, 0.0
        %vm455 = vcmp.gt.f32.partialorder %v435, 0.0
        %v456 = vsel %vm454, 1, 0
        %v457 = vsel %vm455, 1, 0
        %458 = vset.pattern.permute.xlu0 3
        %459 = vperm.xlu0 %458, %v456
        %v460 = vpop.permute.xlu0 %459
        %461 = vset.pattern.permute.xlu0 3
        %462 = vperm.xlu0 %461, %v457
        %v463 = vpop.permute.xlu0 %462
        %vm464 = vcmp.eq.s32.totalorder %v460, 1
        %vm465 = vcmp.eq.s32.totalorder %v463, 1
        %v466 = vlaneseq
        %v467 = vshrl.u32 %v466, 7
        %v468 = vsub.s32 7, %v467
        %v469 = vrot.slane %v329, %v468
        %v470 = vlaneseq
        %v471 = vshrl.u32 %v470, 7
        %v472 = vsub.s32 6, %v471
        %v473 = vrot.slane %v329, %v472
        %v474 = vsel %vm464, %v469, %v473
        %v475 = vsel %vm465, %v469, %v473
        %v476 = vadd.f32 %v446, %v474
        %v477 = vadd.f32 %v447, %v475
        %vm478 = vcmp.eq.s32.totalorder %v331, 3
        %v479 = vsel %vm478, 1, 0
        %v480 = vmul.u32 %v460, %v479
        %v481 = vmul.u32 %v463, %v479
        %v482 = vadd.s32 %v452, %v480
        %v483 = vadd.s32 %v453, %v481
        %484 = vst.msk [vmem:[%s219] sm:$0xff] %vm246, %v476
        %485 = vst.msk [vmem:[%s219 + $0x8] sm:$0xff] %vm246, %v477
        %vm486 = vcmask 31744
        %487 = vst.msk [vmem:[%s238] sm:$0xff] %vm486, %v482
        %488 = vst.msk [vmem:[%s238 + $0x8] sm:$0xff] %vm486, %v483
        %s489 = sand.u32 %s117, 1
        %s490 = scalar_lea.sflag [#allocation3], %s489
        %s491 = sand.u32 %s117, 1
        %s492 = smul.addr %s491, 16
        %s493 = scalar_lea.vmem [#allocation2], %s492
        %s494 = smul.u32 2, %s20
        %p495 = scmp.lt.s32.totalorder %s494, 3
        %s496 = scalar_select %p495, %s494, 3
        %s497 = smul.addr %s496, 8
        %s498 = scalar_lea.vmem %s5, %s497
        // Predicated region
        $region37: #{tpu_custom_call.1} parent=35 // pred_check
          %p499 = pneg %p127
        $region38: #{tpu_custom_call.1} parent=35 // pred_check_branch
          %501 = sbr.rel (%p499) target = $region40
        $region39: #{tpu_custom_call.1} parent=35 // pred_region
          %s502 = smul.u32 2, %s20
          %s504 = ssub.s32 256, 256
          %505 = vsyncadd %s490, %s504
          %s506 = smul.addr %s502, 128
          %s507 = scalar_lea.hbm %s4, %s506
          %s508 = sshll.u32 %s493, 4
          %s509 = int_to_ptr.vmem [resolvable:$true] %s508
          %514 = dma.vmem_to_hbm [thread:$0]  %s509, 256, %s507, %s490, 128, 128, 8
        $region40: #{tpu_custom_call.1} parent=35 // pred_fallthru
          _
        // Predicated region
        $region41: #{tpu_custom_call.1} parent=35 // pred_check
          %p515 = pneg %p153
        $region42: #{tpu_custom_call.1} parent=35 // pred_check_branch
          %517 = sbr.rel (%p515) target = $region44
        $region43: #{tpu_custom_call.1} parent=35 // pred_region
          %s518 = smul.u32 2, %s20
        $region44: #{tpu_custom_call.1} parent=35 // pred_fallthru
          _
      $region36: #{tpu_custom_call.1} parent=5 // pred_fallthru
        _
      %p519 = scmp.le.s32.totalorder 2, %s15
      // Predicated region
      $region45: #{tpu_custom_call.1} parent=5 // pred_check
        %p520 = pneg %p519
      $region46: #{tpu_custom_call.1} parent=5 // pred_check_branch
        %522 = sbr.rel (%p520) target = $region48
      $region47: #{tpu_custom_call.1} parent=5 // pred_region
        %s523 = ssub.s32 %s15, 2
        // Predicated region
        $region49: #{tpu_custom_call.1} parent=47 // pred_check
          %p524 = pneg %p133
        $region50: #{tpu_custom_call.1} parent=47 // pred_check_branch
          %526 = sbr.rel (%p524) target = $region52
        $region51: #{tpu_custom_call.1} parent=47 // pred_region
          %s527 = sand.u32 %s118, 1
          %s528 = scalar_lea.sflag [#allocation3], %s527
          %s529 = sand.u32 %s118, 1
          %s530 = smul.addr %s529, 16
          %s531 = scalar_lea.vmem [#allocation2], %s530
          %532 = dma.done %s528, 256
        $region52: #{tpu_custom_call.1} parent=47 // pred_fallthru
          _
        // Predicated region
        $region53: #{tpu_custom_call.1} parent=47 // pred_check
          %p533 = pneg %p159
        $region54: #{tpu_custom_call.1} parent=47 // pred_check_branch
          %535 = sbr.rel (%p533) target = $region56
        $region55: #{tpu_custom_call.1} parent=47 // pred_region
          %s536 = smul.u32 2, %s21
          %p537 = scmp.lt.s32.totalorder %s536, 3
          %s538 = scalar_select %p537, %s536, 3
          %s539 = smul.addr %s538, 8
          %s540 = scalar_lea.vmem %s5, %s539
        $region56: #{tpu_custom_call.1} parent=47 // pred_fallthru
          _
      $region48: #{tpu_custom_call.1} parent=5 // pred_fallthru
        _
    $region6: #{tpu_custom_call.1} parent=1 // loop_footer
      %s19 = sadd.s32 1, %s15
    $region7: #{tpu_custom_call.1} parent=1 // loop_footer_branch
      %14 = sbr.rel target = $region3
    $region8: #{tpu_custom_call.1} parent=1 // loop_exit
      _
    %541 = vsyncpa [#allocation3], 1
    %s542 = scalar_lea.sflag [#allocation3], 1
    %543 = vsyncpa %s542, 1

</llo_original>
